<compile_context>
chip_gen: v5e
topology: v5e:2x2
jax: 0.10.0
libtpu: 0.0.40
codegen_flags: <defaults>
</compile_context>

<pallas_src>
import functools

import jax
import jax.numpy as jnp
import numpy as np
from jax.experimental import pallas as pl
from jax.experimental.pallas import tpu as pltpu


def _fm_kernel(x_ref, vaug_ref, s_ref, b_ref, out_ref, *, latent_dim):
    """Fused FM forward for one batch tile.

    x:(TB,In); vaug:(In,L+1) = [v | w.T]; s:(1,In) = rowsum(v*v); b:(1,1)
    -> out:(TB,1)
    """
    x = x_ref[...]                                                   # (TB, In)

    # Single MXU stream: columns [:L] are x@v, column L is the linear term x@w.
    xv_aug = jnp.dot(x, vaug_ref[...], preferred_element_type=jnp.float32)

    xv = xv_aug[:, :latent_dim]                                      # (TB, L)
    lin = xv_aug[:, latent_dim:latent_dim + 1]                       # (TB, 1)

    # sum_k (x@v)_k^2   (square_of_sum reduced over the latent axis)
    sq_of_sum = jnp.sum(xv * xv, axis=1, keepdims=True)              # (TB, 1)
    # sum_k ((x^2)@(v^2))_k == (x*x) . rowsum(v*v): VPU mul + lane reduce,
    # no second matmul and no (TB, In) MXU-operand temporary.
    sum_of_sq = jnp.sum((x * x) * s_ref[...], axis=1, keepdims=True)  # (TB, 1)

    out = lin + b_ref[...] + 0.5 * (sq_of_sum - sum_of_sq)
    out_ref[...] = out.astype(out_ref.dtype)


def _round_up(a, m):
    return (a + m - 1) // m * m


@functools.partial(jax.jit, static_argnames=("row_tile",))
def factorization_machine(x, v, w_row, bias, *, row_tile=1024):
    """x:(B,In), v:(In,L), w_row:(1,In) (= nn.Linear weight), bias:(1,1)."""
    B, In = x.shape
    In_v, L = v.shape
    assert In == In_v and w_row.shape == (1, In) and bias.shape == (1, 1)

    # Tiny parameter packing (done once under jit, negligible next to x traffic).
    v_aug = jnp.concatenate([v, w_row.T], axis=1)                    # (In, L+1)
    s_row = jnp.sum(v * v, axis=1)[None, :]                          # (1, In)

    # Effective tile: cap at the batch rounded up to the sublane multiple (8),
    # so small batches run in a single grid step; no HBM padding copy of x.
    # The ragged last block (if any) relies on masked OOB stores; each output
    # row depends only on its own input row, so OOB input garbage is inert.
    eff_tile = min(row_tile, _round_up(B, 8))
    num_tiles = pl.cdiv(B, eff_tile)

    return pl.pallas_call(
        functools.partial(_fm_kernel, latent_dim=L),
        out_shape=jax.ShapeDtypeStruct((B, 1), x.dtype),
        grid_spec=pltpu.PrefetchScalarGridSpec(
            num_scalar_prefetch=0,
            grid=(num_tiles,),
            in_specs=[
                # Activations: the only per-step DMA stream.
                pl.BlockSpec((eff_tile, In), lambda i: (i, 0)),
                # Constant parameters: constant index_map -> fetched once,
                # VMEM-resident across all grid steps.
                pl.BlockSpec((In, L + 1), lambda i: (0, 0)),
                pl.BlockSpec((1, In), lambda i: (0, 0)),
                pl.BlockSpec((1, 1), lambda i: (0, 0)),
            ],
            out_specs=pl.BlockSpec((eff_tile, 1), lambda i: (i, 0)),
        ),
        compiler_params=pltpu.CompilerParams(
            dimension_semantics=("parallel",),
        ),
    )(x, v_aug, s_row, bias)


if __name__ == "__main__":
    # Small shapes consistent with the module: dense FM over a 64-dim feature
    # vector with a 16-dim latent factorization.
    batch, input_dim, latent_dim = 200, 64, 16

    key = jax.random.PRNGKey(0)
    kx, kv, kw, kb = jax.random.split(key, 4)

    # Parameter init mirroring PyTorch: v ~ torch.rand = U(0,1);
    # nn.Linear weight/bias ~ U(-1/sqrt(in_features), 1/sqrt(in_features)).
    v = jax.random.uniform(kv, (input_dim, latent_dim), dtype=jnp.float32)
    bound = 1.0 / float(np.sqrt(input_dim))
    w_row = jax.random.uniform(
        kw, (1, input_dim), dtype=jnp.float32, minval=-bound, maxval=bound
    )
    bias = jax.random.uniform(
        kb, (1, 1), dtype=jnp.float32, minval=-bound, maxval=bound
    )

    # Dense input features.
    x = jax.random.uniform(kx, (batch, input_dim), dtype=jnp.float32)

    # --- run kernel (batch=200 -> eff_tile=200, single grid step) ---
    out = factorization_machine(x, v, w_row, bias)
    out = jax.block_until_ready(out)

    # --- pure-JAX reference at highest matmul precision ---
    hp = jax.lax.Precision.HIGHEST
    lin_ref = jnp.dot(x, w_row.T, precision=hp) + bias
    pair_ref = jnp.sum(
        jnp.dot(x, v, precision=hp) ** 2 - jnp.dot(x * x, v * v, precision=hp),
        axis=1,
        keepdims=True,
    )
    ref = lin_ref + 0.5 * pair_ref

    assert out.shape == (batch, 1)
    # Reference is computed at Precision.HIGHEST; the bound is kept at 5e-3
    # (vs 2e-2 before) only to cover a possible reduced-precision f32 MXU path
    # in the Mosaic matmul — when both take the full-f32 path they agree ~1e-5.
    np.testing.assert_allclose(np.asarray(out), np.asarray(ref), rtol=5e-3, atol=1e-3)

    print("KERNEL_OK")
</pallas_src>

<mosaic_0001>
module attributes {stable_mosaic.version = 11 : i64} {
  func.func @_fm_kernel(%arg0: i32, %arg1: memref<200x64xf32, #tpu.memory_space<vmem>>, %arg2: memref<64x17xf32, #tpu.memory_space<vmem>>, %arg3: memref<1x64xf32, #tpu.memory_space<vmem>>, %arg4: memref<1x1xf32, #tpu.memory_space<vmem>>, %arg5: memref<200x1xf32, #tpu.memory_space<vmem>>) attributes {dimension_semantics = [#tpu.dimension_semantics<parallel>], iteration_bounds = array<i64: 1>, scalar_prefetch = 0 : i64, scratch_operands = 0 : i64, tpu.core_type = #tpu.core_type<tc>, window_params = [{transform_indices = @transform_0, window_bounds = array<i64: 200, 64>}, {pipeline_mode = #tpu.pipeline_mode<synchronous>, transform_indices = @transform_1, window_bounds = array<i64: 64, 17>}, {pipeline_mode = #tpu.pipeline_mode<synchronous>, transform_indices = @transform_2, window_bounds = array<i64: 1, 64>}, {pipeline_mode = #tpu.pipeline_mode<synchronous>, transform_indices = @transform_3, window_bounds = array<i64: 1, 1>}, {transform_indices = @transform_4, window_bounds = array<i64: 200, 1>}]} {
    %c0 = arith.constant 0 : index
    %c0_0 = arith.constant 0 : index
    %0 = vector.load %arg1[%c0, %c0_0] : memref<200x64xf32, #tpu.memory_space<vmem>>, vector<200x64xf32>
    %c0_1 = arith.constant 0 : index
    %c0_2 = arith.constant 0 : index
    %1 = vector.load %arg2[%c0_1, %c0_2] : memref<64x17xf32, #tpu.memory_space<vmem>>, vector<64x17xf32>
    %cst = arith.constant dense<0.000000e+00> : vector<200x17xf32>
    %2 = tpu.matmul %0, %1, %cst {dimension_numbers = #tpu.dot_dimension_numbers<[1], [0], [0], [1], [0, 0, 1, 1], [], []>} : vector<200x64xf32>, vector<64x17xf32>, vector<200x17xf32> -> vector<200x17xf32>
    %3 = vector.extract_strided_slice %2 {offsets = [0, 0], sizes = [200, 16], strides = [1, 1]} : vector<200x17xf32> to vector<200x16xf32>
    %4 = vector.extract_strided_slice %2 {offsets = [0, 16], sizes = [200, 1], strides = [1, 1]} : vector<200x17xf32> to vector<200x1xf32>
    %5 = arith.mulf %3, %3 : vector<200x16xf32>
    %cst_3 = arith.constant dense<0.000000e+00> : vector<200xf32>
    %6 = vector.multi_reduction <add>, %5, %cst_3 [1] : vector<200x16xf32> to vector<200xf32>
    %7 = vector.shape_cast %6 : vector<200xf32> to vector<200x1xf32>
    %8 = arith.mulf %0, %0 : vector<200x64xf32>
    %c0_4 = arith.constant 0 : index
    %c0_5 = arith.constant 0 : index
    %9 = vector.load %arg3[%c0_4, %c0_5] : memref<1x64xf32, #tpu.memory_space<vmem>>, vector<1x64xf32>
    %10 = vector.broadcast %9 : vector<1x64xf32> to vector<200x64xf32>
    %11 = arith.mulf %8, %10 : vector<200x64xf32>
    %cst_6 = arith.constant dense<0.000000e+00> : vector<200xf32>
    %12 = vector.multi_reduction <add>, %11, %cst_6 [1] : vector<200x64xf32> to vector<200xf32>
    %13 = vector.shape_cast %12 : vector<200xf32> to vector<200x1xf32>
    %c0_7 = arith.constant 0 : index
    %c0_8 = arith.constant 0 : index
    %14 = vector.load %arg4[%c0_7, %c0_8] : memref<1x1xf32, #tpu.memory_space<vmem>>, vector<1x1xf32>
    %15 = vector.broadcast %14 : vector<1x1xf32> to vector<200x1xf32>
    %16 = arith.addf %4, %15 : vector<200x1xf32>
    %17 = arith.subf %7, %13 : vector<200x1xf32>
    %cst_9 = arith.constant 5.000000e-01 : f32
    %18 = vector.broadcast %cst_9 : f32 to vector<200x1xf32>
    %19 = arith.mulf %18, %17 : vector<200x1xf32>
    %20 = arith.addf %16, %19 : vector<200x1xf32>
    %c0_10 = arith.constant 0 : index
    %c0_11 = arith.constant 0 : index
    %21 = vector.load %arg5[%c0_10, %c0_11] : memref<200x1xf32, #tpu.memory_space<vmem>>, vector<200x1xf32>
    tpu.vector_store %arg5[%c0_10, %c0_11], %20 {strides = array<i32>} : memref<200x1xf32, #tpu.memory_space<vmem>>, vector<200x1xf32>,
    return
  }
  func.func @transform_0(%arg0: i32) -> (i32, i32) {
    %c0_i32 = arith.constant 0 : i32
    %c0_i32_0 = arith.constant 0 : i32
    return %arg0, %c0_i32 : i32, i32
  }
  func.func @transform_1(%arg0: i32) -> (i32, i32) {
    %c0_i32 = arith.constant 0 : i32
    %c0_i32_0 = arith.constant 0 : i32
    %c0_i32_1 = arith.constant 0 : i32
    return %c0_i32, %c0_i32_0 : i32, i32
  }
  func.func @transform_2(%arg0: i32) -> (i32, i32) {
    %c0_i32 = arith.constant 0 : i32
    %c0_i32_0 = arith.constant 0 : i32
    %c0_i32_1 = arith.constant 0 : i32
    return %c0_i32, %c0_i32_0 : i32, i32
  }
  func.func @transform_3(%arg0: i32) -> (i32, i32) {
    %c0_i32 = arith.constant 0 : i32
    %c0_i32_0 = arith.constant 0 : i32
    %c0_i32_1 = arith.constant 0 : i32
    return %c0_i32, %c0_i32_0 : i32, i32
  }
  func.func @transform_4(%arg0: i32) -> (i32, i32) {
    %c0_i32 = arith.constant 0 : i32
    %c0_i32_0 = arith.constant 0 : i32
    return %arg0, %c0_i32 : i32, i32
  }
}

</mosaic_0001>

<llo_original>
// kernel: factorization_machine.1
$region0: #{factorization_machine.1}
  #allocation0 [shape = 'u32[]', space=smem, size = 0x4, offset = 0x4, fixed_abs, tag = 'smem constant byte address 0x4 - core index']
  #allocation1 [shape = 'u32[72,128]{1,0:T(1,128)}', space=vmem, size = 0x9000, scoped, tag = 'internal scratch']
  #allocation2 [shape = 'f32[1,1]{1,0:T(1,128)S(1)}', space=vmem, size = 0x200, scoped, tag = 'scoped memory for factorization_machine.1']
  %s0 = inlined_call_operand.vmem [shape: f32[200,64], index: 0, kind: input, shape index: {}]
  %s1 = inlined_call_operand.vmem [shape: f32[64,17], index: 1, kind: input, shape index: {}]
  %s2 = inlined_call_operand.vmem [shape: f32[1,64], index: 2, kind: input, shape index: {}]
  %s3 = inlined_call_operand.<no memory space> [shape: f32[1,1], index: 3, kind: input, shape index: {}]
  %s4 = inlined_call_operand.vmem [shape: f32[200,1], index: 4, kind: output, shape index: {}]
  %s5 = sld [smem:[#allocation0]]
  $region26: #{factorization_machine.1} parent=0
    _
  %s7 = ssub.s32 1, %s5
  %s8 = scalar_select 0, %s7, %s5
  %v9 = vstv %s3
  %10 = vst [vmem:[#allocation2] sm:$0x1] %v9
  // Predicated region
  $region2: #{factorization_machine.1} parent=0 // pred_check
    _
  $region3: #{factorization_machine.1} parent=0 // pred_check_branch
    %12 = sbr.rel (0) target = $region5
  $region4: #{factorization_machine.1} parent=0 // pred_region
    _
  $region5: #{factorization_machine.1} parent=0 // pred_fallthru
    _
  // Predicated region
  $region6: #{factorization_machine.1} parent=0 // pred_check
    _
  $region7: #{factorization_machine.1} parent=0 // pred_check_branch
    %14 = sbr.rel (0) target = $region9
  $region8: #{factorization_machine.1} parent=0 // pred_region
    _
  $region9: #{factorization_machine.1} parent=0 // pred_fallthru
    _
  // Predicated region
  $region10: #{factorization_machine.1} parent=0 // pred_check
    _
  $region11: #{factorization_machine.1} parent=0 // pred_check_branch
    %16 = sbr.rel (0) target = $region13
  $region12: #{factorization_machine.1} parent=0 // pred_region
    _
  $region13: #{factorization_machine.1} parent=0 // pred_fallthru
    _
  // Predicated region
  $region14: #{factorization_machine.1} parent=0 // pred_check
    _
  $region15: #{factorization_machine.1} parent=0 // pred_check_branch
    %18 = sbr.rel (0) target = $region17
  $region16: #{factorization_machine.1} parent=0 // pred_region
    _
  $region17: #{factorization_machine.1} parent=0 // pred_fallthru
    _
  %v19 = vld [vmem:[%s0] sm:$0xff]
  %v20 = vld [vmem:[%s0 + $0x8] sm:$0xff]
  %v21 = vld [vmem:[%s0 + $0x10] sm:$0xff]
  %v22 = vld [vmem:[%s0 + $0x18] sm:$0xff]
  %v23 = vld [vmem:[%s0 + $0x20] sm:$0xff]
  %v24 = vld [vmem:[%s0 + $0x28] sm:$0xff]
  %v25 = vld [vmem:[%s0 + $0x30] sm:$0xff]
  %v26 = vld [vmem:[%s0 + $0x38] sm:$0xff]
  %v27 = vld [vmem:[%s0 + $0x40] sm:$0xff]
  %v28 = vld [vmem:[%s0 + $0x48] sm:$0xff]
  %v29 = vld [vmem:[%s0 + $0x50] sm:$0xff]
  %v30 = vld [vmem:[%s0 + $0x58] sm:$0xff]
  %v31 = vld [vmem:[%s0 + $0x60] sm:$0xff]
  %v32 = vld [vmem:[%s0 + $0x68] sm:$0xff]
  %v33 = vld [vmem:[%s0 + $0x70] sm:$0xff]
  %v34 = vld [vmem:[%s0 + $0x78] sm:$0xff]
  %v35 = vld [vmem:[%s0 + $0x80] sm:$0xff]
  %v36 = vld [vmem:[%s0 + $0x88] sm:$0xff]
  %v37 = vld [vmem:[%s0 + $0x90] sm:$0xff]
  %v38 = vld [vmem:[%s0 + $0x98] sm:$0xff]
  %v39 = vld [vmem:[%s0 + $0xa0] sm:$0xff]
  %v40 = vld [vmem:[%s0 + $0xa8] sm:$0xff]
  %v41 = vld [vmem:[%s0 + $0xb0] sm:$0xff]
  %v42 = vld [vmem:[%s0 + $0xb8] sm:$0xff]
  %v43 = vld [vmem:[%s0 + $0xc0] sm:$0xff]
  %v44 = vld [vmem:[%s1] sm:$0xff]
  %v45 = vld [vmem:[%s1 + $0x8] sm:$0xff]
  %v46 = vld [vmem:[%s1 + $0x10] sm:$0xff]
  %v47 = vld [vmem:[%s1 + $0x18] sm:$0xff]
  %v48 = vld [vmem:[%s1 + $0x20] sm:$0xff]
  %v49 = vld [vmem:[%s1 + $0x28] sm:$0xff]
  %v50 = vld [vmem:[%s1 + $0x30] sm:$0xff]
  %v51 = vld [vmem:[%s1 + $0x38] sm:$0xff]
  %vm52 = vcmask 523264
  %v54 = vsel %vm52, %v19, 0
  %v57 = vsel %vm52, %v20, 0
  %v60 = vsel %vm52, %v21, 0
  %v63 = vsel %vm52, %v22, 0
  %v66 = vsel %vm52, %v23, 0
  %v69 = vsel %vm52, %v24, 0
  %v72 = vsel %vm52, %v25, 0
  %v75 = vsel %vm52, %v26, 0
  %v78 = vsel %vm52, %v27, 0
  %v81 = vsel %vm52, %v28, 0
  %v84 = vsel %vm52, %v29, 0
  %v87 = vsel %vm52, %v30, 0
  %v90 = vsel %vm52, %v31, 0
  %v93 = vsel %vm52, %v32, 0
  %v96 = vsel %vm52, %v33, 0
  %v99 = vsel %vm52, %v34, 0
  %v102 = vsel %vm52, %v35, 0
  %v105 = vsel %vm52, %v36, 0
  %v108 = vsel %vm52, %v37, 0
  %v111 = vsel %vm52, %v38, 0
  %v114 = vsel %vm52, %v39, 0
  %v117 = vsel %vm52, %v40, 0
  %v120 = vsel %vm52, %v41, 0
  %v123 = vsel %vm52, %v42, 0
  %v126 = vsel %vm52, %v43, 0
  %128 = vmatpush.msra.mxu0 0.0
  %129 = vmatpush.msra.mxu0 0.0
  %130 = vmatpush.msra.mxu0 0.0
  %131 = vmatpush.msra.mxu0 0.0
  %132 = vmatpush.msra.mxu0 0.0
  %133 = vmatpush.msra.mxu0 0.0
  %134 = vmatpush.msra.mxu0 0.0
  %135 = vmatpush.msra.mxu0 0.0
  %136 = vmatpush.msra.mxu0 %v51
  %137 = vmatpush.msra.mxu0 %v50
  %138 = vmatpush.msra.mxu0 %v49
  %139 = vmatpush.msra.mxu0 %v48
  %140 = vmatpush.msra.mxu0 %v47
  %141 = vmatpush.msra.mxu0 %v46
  %142 = vmatpush.msra.mxu0 %v45
  %143 = vmatpush.msra.mxu0 %v44
  %144 = vmatmul.f32.gmra.mxu0 %v54
  %v145 = vpop.f32.mrf.mxu0
  %v146 = vadd.f32 0.0, %v145
  %147 = vmatmul.f32.gmra.mxu0 %v57
  %v148 = vpop.f32.mrf.mxu0
  %v149 = vadd.f32 0.0, %v148
  %150 = vmatmul.f32.gmra.mxu0 %v60
  %v151 = vpop.f32.mrf.mxu0
  %v152 = vadd.f32 0.0, %v151
  %153 = vmatmul.f32.gmra.mxu0 %v63
  %v154 = vpop.f32.mrf.mxu0
  %v155 = vadd.f32 0.0, %v154
  %156 = vmatmul.f32.gmra.mxu0 %v66
  %v157 = vpop.f32.mrf.mxu0
  %v158 = vadd.f32 0.0, %v157
  %159 = vmatmul.f32.gmra.mxu0 %v69
  %v160 = vpop.f32.mrf.mxu0
  %v161 = vadd.f32 0.0, %v160
  %162 = vmatmul.f32.gmra.mxu0 %v72
  %v163 = vpop.f32.mrf.mxu0
  %v164 = vadd.f32 0.0, %v163
  %165 = vmatmul.f32.gmra.mxu0 %v75
  %v166 = vpop.f32.mrf.mxu0
  %v167 = vadd.f32 0.0, %v166
  %168 = vmatmul.f32.gmra.mxu0 %v78
  %v169 = vpop.f32.mrf.mxu0
  %v170 = vadd.f32 0.0, %v169
  %171 = vmatmul.f32.gmra.mxu0 %v81
  %v172 = vpop.f32.mrf.mxu0
  %v173 = vadd.f32 0.0, %v172
  %174 = vmatmul.f32.gmra.mxu0 %v84
  %v175 = vpop.f32.mrf.mxu0
  %v176 = vadd.f32 0.0, %v175
  %177 = vmatmul.f32.gmra.mxu0 %v87
  %v178 = vpop.f32.mrf.mxu0
  %v179 = vadd.f32 0.0, %v178
  %180 = vmatmul.f32.gmra.mxu0 %v90
  %v181 = vpop.f32.mrf.mxu0
  %v182 = vadd.f32 0.0, %v181
  %183 = vmatmul.f32.gmra.mxu0 %v93
  %v184 = vpop.f32.mrf.mxu0
  %v185 = vadd.f32 0.0, %v184
  %186 = vmatmul.f32.gmra.mxu0 %v96
  %v187 = vpop.f32.mrf.mxu0
  %v188 = vadd.f32 0.0, %v187
  %189 = vmatmul.f32.gmra.mxu0 %v99
  %v190 = vpop.f32.mrf.mxu0
  %v191 = vadd.f32 0.0, %v190
  %192 = vmatmul.f32.gmra.mxu0 %v102
  %v193 = vpop.f32.mrf.mxu0
  %v194 = vadd.f32 0.0, %v193
  %195 = vmatmul.f32.gmra.mxu0 %v105
  %v196 = vpop.f32.mrf.mxu0
  %v197 = vadd.f32 0.0, %v196
  %198 = vmatmul.f32.gmra.mxu0 %v108
  %v199 = vpop.f32.mrf.mxu0
  %v200 = vadd.f32 0.0, %v199
  %201 = vmatmul.f32.gmra.mxu0 %v111
  %v202 = vpop.f32.mrf.mxu0
  %v203 = vadd.f32 0.0, %v202
  %204 = vmatmul.f32.gmra.mxu0 %v114
  %v205 = vpop.f32.mrf.mxu0
  %v206 = vadd.f32 0.0, %v205
  %207 = vmatmul.f32.gmra.mxu0 %v117
  %v208 = vpop.f32.mrf.mxu0
  %v209 = vadd.f32 0.0, %v208
  %210 = vmatmul.f32.gmra.mxu0 %v120
  %v211 = vpop.f32.mrf.mxu0
  %v212 = vadd.f32 0.0, %v211
  %213 = vmatmul.f32.gmra.mxu0 %v123
  %v214 = vpop.f32.mrf.mxu0
  %v215 = vadd.f32 0.0, %v214
  %216 = vmatmul.f32.gmra.mxu0 %v126
  %v217 = vpop.f32.mrf.mxu0
  %v218 = vadd.f32 0.0, %v217
  %219 = vdwg.mxu0
  %v220 = vmul.f32 %v146, %v146
  %v221 = vmul.f32 %v149, %v149
  %v222 = vmul.f32 %v152, %v152
  %v223 = vmul.f32 %v155, %v155
  %v224 = vmul.f32 %v158, %v158
  %v225 = vmul.f32 %v161, %v161
  %v226 = vmul.f32 %v164, %v164
  %v227 = vmul.f32 %v167, %v167
  %v228 = vmul.f32 %v170, %v170
  %v229 = vmul.f32 %v173, %v173
  %v230 = vmul.f32 %v176, %v176
  %v231 = vmul.f32 %v179, %v179
  %v232 = vmul.f32 %v182, %v182
  %v233 = vmul.f32 %v185, %v185
  %v234 = vmul.f32 %v188, %v188
  %v235 = vmul.f32 %v191, %v191
  %v236 = vmul.f32 %v194, %v194
  %v237 = vmul.f32 %v197, %v197
  %v238 = vmul.f32 %v200, %v200
  %v239 = vmul.f32 %v203, %v203
  %v240 = vmul.f32 %v206, %v206
  %v241 = vmul.f32 %v209, %v209
  %v242 = vmul.f32 %v212, %v212
  %v243 = vmul.f32 %v215, %v215
  %v244 = vmul.f32 %v218, %v218
  %vm245 = vcmask 130048
  %v246 = vsel %vm245, %v220, 0.0
  %247 = vadd.xlane.f32.xlu0 %v246
  %v248 = vpop.xlane.xlu0 %247
  %v249 = vsel %vm245, %v221, 0.0
  %250 = vadd.xlane.f32.xlu0 %v249
  %v251 = vpop.xlane.xlu0 %250
  %v252 = vsel %vm245, %v222, 0.0
  %253 = vadd.xlane.f32.xlu0 %v252
  %v254 = vpop.xlane.xlu0 %253
  %v255 = vsel %vm245, %v223, 0.0
  %256 = vadd.xlane.f32.xlu0 %v255
  %v257 = vpop.xlane.xlu0 %256
  %v258 = vsel %vm245, %v224, 0.0
  %259 = vadd.xlane.f32.xlu0 %v258
  %v260 = vpop.xlane.xlu0 %259
  %v261 = vsel %vm245, %v225, 0.0
  %262 = vadd.xlane.f32.xlu0 %v261
  %v263 = vpop.xlane.xlu0 %262
  %v264 = vsel %vm245, %v226, 0.0
  %265 = vadd.xlane.f32.xlu0 %v264
  %v266 = vpop.xlane.xlu0 %265
  %v267 = vsel %vm245, %v227, 0.0
  %268 = vadd.xlane.f32.xlu0 %v267
  %v269 = vpop.xlane.xlu0 %268
  %v270 = vsel %vm245, %v228, 0.0
  %271 = vadd.xlane.f32.xlu0 %v270
  %v272 = vpop.xlane.xlu0 %271
  %v273 = vsel %vm245, %v229, 0.0
  %274 = vadd.xlane.f32.xlu0 %v273
  %v275 = vpop.xlane.xlu0 %274
  %v276 = vsel %vm245, %v230, 0.0
  %277 = vadd.xlane.f32.xlu0 %v276
  %v278 = vpop.xlane.xlu0 %277
  %v279 = vsel %vm245, %v231, 0.0
  %280 = vadd.xlane.f32.xlu0 %v279
  %v281 = vpop.xlane.xlu0 %280
  %v282 = vsel %vm245, %v232, 0.0
  %283 = vadd.xlane.f32.xlu0 %v282
  %v284 = vpop.xlane.xlu0 %283
  %v285 = vsel %vm245, %v233, 0.0
  %286 = vadd.xlane.f32.xlu0 %v285
  %v287 = vpop.xlane.xlu0 %286
  %v288 = vsel %vm245, %v234, 0.0
  %289 = vadd.xlane.f32.xlu0 %v288
  %v290 = vpop.xlane.xlu0 %289
  %v291 = vsel %vm245, %v235, 0.0
  %292 = vadd.xlane.f32.xlu0 %v291
  %v293 = vpop.xlane.xlu0 %292
  %v294 = vsel %vm245, %v236, 0.0
  %295 = vadd.xlane.f32.xlu0 %v294
  %v296 = vpop.xlane.xlu0 %295
  %v297 = vsel %vm245, %v237, 0.0
  %298 = vadd.xlane.f32.xlu0 %v297
  %v299 = vpop.xlane.xlu0 %298
  %v300 = vsel %vm245, %v238, 0.0
  %301 = vadd.xlane.f32.xlu0 %v300
  %v302 = vpop.xlane.xlu0 %301
  %v303 = vsel %vm245, %v239, 0.0
  %304 = vadd.xlane.f32.xlu0 %v303
  %v305 = vpop.xlane.xlu0 %304
  %v306 = vsel %vm245, %v240, 0.0
  %307 = vadd.xlane.f32.xlu0 %v306
  %v308 = vpop.xlane.xlu0 %307
  %v309 = vsel %vm245, %v241, 0.0
  %310 = vadd.xlane.f32.xlu0 %v309
  %v311 = vpop.xlane.xlu0 %310
  %v312 = vsel %vm245, %v242, 0.0
  %313 = vadd.xlane.f32.xlu0 %v312
  %v314 = vpop.xlane.xlu0 %313
  %v315 = vsel %vm245, %v243, 0.0
  %316 = vadd.xlane.f32.xlu0 %v315
  %v317 = vpop.xlane.xlu0 %316
  %v318 = vsel %vm245, %v244, 0.0
  %319 = vadd.xlane.f32.xlu0 %v318
  %v320 = vpop.xlane.xlu0 %319
  %v321 = vmul.f32 %v19, %v19
  %v322 = vmul.f32 %v20, %v20
  %v323 = vmul.f32 %v21, %v21
  %v324 = vmul.f32 %v22, %v22
  %v325 = vmul.f32 %v23, %v23
  %v326 = vmul.f32 %v24, %v24
  %v327 = vmul.f32 %v25, %v25
  %v328 = vmul.f32 %v26, %v26
  %v329 = vmul.f32 %v27, %v27
  %v330 = vmul.f32 %v28, %v28
  %v331 = vmul.f32 %v29, %v29
  %v332 = vmul.f32 %v30, %v30
  %v333 = vmul.f32 %v31, %v31
  %v334 = vmul.f32 %v32, %v32
  %v335 = vmul.f32 %v33, %v33
  %v336 = vmul.f32 %v34, %v34
  %v337 = vmul.f32 %v35, %v35
  %v338 = vmul.f32 %v36, %v36
  %v339 = vmul.f32 %v37, %v37
  %v340 = vmul.f32 %v38, %v38
  %v341 = vmul.f32 %v39, %v39
  %v342 = vmul.f32 %v40, %v40
  %v343 = vmul.f32 %v41, %v41
  %v344 = vmul.f32 %v42, %v42
  %v345 = vmul.f32 %v43, %v43
  %v346 = vld [vmem:[%s2] sm:$0x1]
  %v348 = vperm.slane %v346, 0
  %v350 = vmul.f32 %v321, %v348
  %v351 = vmul.f32 %v322, %v348
  %v352 = vmul.f32 %v323, %v348
  %v353 = vmul.f32 %v324, %v348
  %v354 = vmul.f32 %v325, %v348
  %v355 = vmul.f32 %v326, %v348
  %v356 = vmul.f32 %v327, %v348
  %v357 = vmul.f32 %v328, %v348
  %v358 = vmul.f32 %v329, %v348
  %v359 = vmul.f32 %v330, %v348
  %v360 = vmul.f32 %v331, %v348
  %v361 = vmul.f32 %v332, %v348
  %v362 = vmul.f32 %v333, %v348
  %v363 = vmul.f32 %v334, %v348
  %v364 = vmul.f32 %v335, %v348
  %v365 = vmul.f32 %v336, %v348
  %v366 = vmul.f32 %v337, %v348
  %v367 = vmul.f32 %v338, %v348
  %v368 = vmul.f32 %v339, %v348
  %v369 = vmul.f32 %v340, %v348
  %v370 = vmul.f32 %v341, %v348
  %v371 = vmul.f32 %v342, %v348
  %v372 = vmul.f32 %v343, %v348
  %v373 = vmul.f32 %v344, %v348
  %v374 = vmul.f32 %v345, %v348
  %v375 = vsel %vm52, %v350, 0.0
  %376 = vadd.xlane.f32.xlu0 %v375
  %v377 = vpop.xlane.xlu0 %376
  %v378 = vsel %vm52, %v351, 0.0
  %379 = vadd.xlane.f32.xlu0 %v378
  %v380 = vpop.xlane.xlu0 %379
  %v381 = vsel %vm52, %v352, 0.0
  %382 = vadd.xlane.f32.xlu0 %v381
  %v383 = vpop.xlane.xlu0 %382
  %v384 = vsel %vm52, %v353, 0.0
  %385 = vadd.xlane.f32.xlu0 %v384
  %v386 = vpop.xlane.xlu0 %385
  %v387 = vsel %vm52, %v354, 0.0
  %388 = vadd.xlane.f32.xlu0 %v387
  %v389 = vpop.xlane.xlu0 %388
  %v390 = vsel %vm52, %v355, 0.0
  %391 = vadd.xlane.f32.xlu0 %v390
  %v392 = vpop.xlane.xlu0 %391
  %v393 = vsel %vm52, %v356, 0.0
  %394 = vadd.xlane.f32.xlu0 %v393
  %v395 = vpop.xlane.xlu0 %394
  %v396 = vsel %vm52, %v357, 0.0
  %397 = vadd.xlane.f32.xlu0 %v396
  %v398 = vpop.xlane.xlu0 %397
  %v399 = vsel %vm52, %v358, 0.0
  %400 = vadd.xlane.f32.xlu0 %v399
  %v401 = vpop.xlane.xlu0 %400
  %v402 = vsel %vm52, %v359, 0.0
  %403 = vadd.xlane.f32.xlu0 %v402
  %v404 = vpop.xlane.xlu0 %403
  %v405 = vsel %vm52, %v360, 0.0
  %406 = vadd.xlane.f32.xlu0 %v405
  %v407 = vpop.xlane.xlu0 %406
  %v408 = vsel %vm52, %v361, 0.0
  %409 = vadd.xlane.f32.xlu0 %v408
  %v410 = vpop.xlane.xlu0 %409
  %v411 = vsel %vm52, %v362, 0.0
  %412 = vadd.xlane.f32.xlu0 %v411
  %v413 = vpop.xlane.xlu0 %412
  %v414 = vsel %vm52, %v363, 0.0
  %415 = vadd.xlane.f32.xlu0 %v414
  %v416 = vpop.xlane.xlu0 %415
  %v417 = vsel %vm52, %v364, 0.0
  %418 = vadd.xlane.f32.xlu0 %v417
  %v419 = vpop.xlane.xlu0 %418
  %v420 = vsel %vm52, %v365, 0.0
  %421 = vadd.xlane.f32.xlu0 %v420
  %v422 = vpop.xlane.xlu0 %421
  %v423 = vsel %vm52, %v366, 0.0
  %424 = vadd.xlane.f32.xlu0 %v423
  %v425 = vpop.xlane.xlu0 %424
  %v426 = vsel %vm52, %v367, 0.0
  %427 = vadd.xlane.f32.xlu0 %v426
  %v428 = vpop.xlane.xlu0 %427
  %v429 = vsel %vm52, %v368, 0.0
  %430 = vadd.xlane.f32.xlu0 %v429
  %v431 = vpop.xlane.xlu0 %430
  %v432 = vsel %vm52, %v369, 0.0
  %433 = vadd.xlane.f32.xlu0 %v432
  %v434 = vpop.xlane.xlu0 %433
  %v435 = vsel %vm52, %v370, 0.0
  %436 = vadd.xlane.f32.xlu0 %v435
  %v437 = vpop.xlane.xlu0 %436
  %v438 = vsel %vm52, %v371, 0.0
  %439 = vadd.xlane.f32.xlu0 %v438
  %v440 = vpop.xlane.xlu0 %439
  %v441 = vsel %vm52, %v372, 0.0
  %442 = vadd.xlane.f32.xlu0 %v441
  %v443 = vpop.xlane.xlu0 %442
  %v444 = vsel %vm52, %v373, 0.0
  %445 = vadd.xlane.f32.xlu0 %v444
  %v446 = vpop.xlane.xlu0 %445
  %v447 = vsel %vm52, %v374, 0.0
  %448 = vadd.xlane.f32.xlu0 %v447
  %v449 = vpop.xlane.xlu0 %448
  %v450 = vld [vmem:[#allocation2] sm:$0x1]
  %v452 = vperm.slane %v450, 0
  %453 = vrot.lane.b32.xlu0 %v452, 16
  %v454 = vpop.permute.xlu0 %453
  %v456 = vadd.f32 %v146, %v454
  %v457 = vadd.f32 %v149, %v454
  %v458 = vadd.f32 %v152, %v454
  %v459 = vadd.f32 %v155, %v454
  %v460 = vadd.f32 %v158, %v454
  %v461 = vadd.f32 %v161, %v454
  %v462 = vadd.f32 %v164, %v454
  %v463 = vadd.f32 %v167, %v454
  %v464 = vadd.f32 %v170, %v454
  %v465 = vadd.f32 %v173, %v454
  %v466 = vadd.f32 %v176, %v454
  %v467 = vadd.f32 %v179, %v454
  %v468 = vadd.f32 %v182, %v454
  %v469 = vadd.f32 %v185, %v454
  %v470 = vadd.f32 %v188, %v454
  %v471 = vadd.f32 %v191, %v454
  %v472 = vadd.f32 %v194, %v454
  %v473 = vadd.f32 %v197, %v454
  %v474 = vadd.f32 %v200, %v454
  %v475 = vadd.f32 %v203, %v454
  %v476 = vadd.f32 %v206, %v454
  %v477 = vadd.f32 %v209, %v454
  %v478 = vadd.f32 %v212, %v454
  %v479 = vadd.f32 %v215, %v454
  %v480 = vadd.f32 %v218, %v454
  %v481 = vsub.f32 %v248, %v377
  %v482 = vsub.f32 %v251, %v380
  %v483 = vsub.f32 %v254, %v383
  %v484 = vsub.f32 %v257, %v386
  %v485 = vsub.f32 %v260, %v389
  %v486 = vsub.f32 %v263, %v392
  %v487 = vsub.f32 %v266, %v395
  %v488 = vsub.f32 %v269, %v398
  %v489 = vsub.f32 %v272, %v401
  %v490 = vsub.f32 %v275, %v404
  %v491 = vsub.f32 %v278, %v407
  %v492 = vsub.f32 %v281, %v410
  %v493 = vsub.f32 %v284, %v413
  %v494 = vsub.f32 %v287, %v416
  %v495 = vsub.f32 %v290, %v419
  %v496 = vsub.f32 %v293, %v422
  %v497 = vsub.f32 %v296, %v425
  %v498 = vsub.f32 %v299, %v428
  %v499 = vsub.f32 %v302, %v431
  %v500 = vsub.f32 %v305, %v434
  %v501 = vsub.f32 %v308, %v437
  %v502 = vsub.f32 %v311, %v440
  %v503 = vsub.f32 %v314, %v443
  %v504 = vsub.f32 %v317, %v446
  %v505 = vsub.f32 %v320, %v449
  %v506 = vmul.f32 %v481, 0.5
  %v507 = vmul.f32 %v482, 0.5
  %v508 = vmul.f32 %v483, 0.5
  %v509 = vmul.f32 %v484, 0.5
  %v510 = vmul.f32 %v485, 0.5
  %v511 = vmul.f32 %v486, 0.5
  %v512 = vmul.f32 %v487, 0.5
  %v513 = vmul.f32 %v488, 0.5
  %v514 = vmul.f32 %v489, 0.5
  %v515 = vmul.f32 %v490, 0.5
  %v516 = vmul.f32 %v491, 0.5
  %v517 = vmul.f32 %v492, 0.5
  %v518 = vmul.f32 %v493, 0.5
  %v519 = vmul.f32 %v494, 0.5
  %v520 = vmul.f32 %v495, 0.5
  %v521 = vmul.f32 %v496, 0.5
  %v522 = vmul.f32 %v497, 0.5
  %v523 = vmul.f32 %v498, 0.5
  %v524 = vmul.f32 %v499, 0.5
  %v525 = vmul.f32 %v500, 0.5
  %v526 = vmul.f32 %v501, 0.5
  %v527 = vmul.f32 %v502, 0.5
  %v528 = vmul.f32 %v503, 0.5
  %v529 = vmul.f32 %v504, 0.5
  %v530 = vmul.f32 %v505, 0.5
  %v531 = vadd.f32 %v456, %v506
  %v532 = vadd.f32 %v457, %v507
  %v533 = vadd.f32 %v458, %v508
  %v534 = vadd.f32 %v459, %v509
  %v535 = vadd.f32 %v460, %v510
  %v536 = vadd.f32 %v461, %v511
  %v537 = vadd.f32 %v462, %v512
  %v538 = vadd.f32 %v463, %v513
  %v539 = vadd.f32 %v464, %v514
  %v540 = vadd.f32 %v465, %v515
  %v541 = vadd.f32 %v466, %v516
  %v542 = vadd.f32 %v467, %v517
  %v543 = vadd.f32 %v468, %v518
  %v544 = vadd.f32 %v469, %v519
  %v545 = vadd.f32 %v470, %v520
  %v546 = vadd.f32 %v471, %v521
  %v547 = vadd.f32 %v472, %v522
  %v548 = vadd.f32 %v473, %v523
  %v549 = vadd.f32 %v474, %v524
  %v550 = vadd.f32 %v475, %v525
  %v551 = vadd.f32 %v476, %v526
  %v552 = vadd.f32 %v477, %v527
  %v553 = vadd.f32 %v478, %v528
  %v554 = vadd.f32 %v479, %v529
  %v555 = vadd.f32 %v480, %v530
  %581 = vrot.lane.b32.xlu0 %v531, 112
  %v582 = vpop.permute.xlu0 %581
  %583 = vrot.lane.b32.xlu0 %v532, 112
  %v584 = vpop.permute.xlu0 %583
  %585 = vrot.lane.b32.xlu0 %v533, 112
  %v586 = vpop.permute.xlu0 %585
  %587 = vrot.lane.b32.xlu0 %v534, 112
  %v588 = vpop.permute.xlu0 %587
  %589 = vrot.lane.b32.xlu0 %v535, 112
  %v590 = vpop.permute.xlu0 %589
  %591 = vrot.lane.b32.xlu0 %v536, 112
  %v592 = vpop.permute.xlu0 %591
  %593 = vrot.lane.b32.xlu0 %v537, 112
  %v594 = vpop.permute.xlu0 %593
  %595 = vrot.lane.b32.xlu0 %v538, 112
  %v596 = vpop.permute.xlu0 %595
  %597 = vrot.lane.b32.xlu0 %v539, 112
  %v598 = vpop.permute.xlu0 %597
  %599 = vrot.lane.b32.xlu0 %v540, 112
  %v600 = vpop.permute.xlu0 %599
  %601 = vrot.lane.b32.xlu0 %v541, 112
  %v602 = vpop.permute.xlu0 %601
  %603 = vrot.lane.b32.xlu0 %v542, 112
  %v604 = vpop.permute.xlu0 %603
  %605 = vrot.lane.b32.xlu0 %v543, 112
  %v606 = vpop.permute.xlu0 %605
  %607 = vrot.lane.b32.xlu0 %v544, 112
  %v608 = vpop.permute.xlu0 %607
  %609 = vrot.lane.b32.xlu0 %v545, 112
  %v610 = vpop.permute.xlu0 %609
  %611 = vrot.lane.b32.xlu0 %v546, 112
  %v612 = vpop.permute.xlu0 %611
  %613 = vrot.lane.b32.xlu0 %v547, 112
  %v614 = vpop.permute.xlu0 %613
  %615 = vrot.lane.b32.xlu0 %v548, 112
  %v616 = vpop.permute.xlu0 %615
  %617 = vrot.lane.b32.xlu0 %v549, 112
  %v618 = vpop.permute.xlu0 %617
  %619 = vrot.lane.b32.xlu0 %v550, 112
  %v620 = vpop.permute.xlu0 %619
  %621 = vrot.lane.b32.xlu0 %v551, 112
  %v622 = vpop.permute.xlu0 %621
  %623 = vrot.lane.b32.xlu0 %v552, 112
  %v624 = vpop.permute.xlu0 %623
  %625 = vrot.lane.b32.xlu0 %v553, 112
  %v626 = vpop.permute.xlu0 %625
  %627 = vrot.lane.b32.xlu0 %v554, 112
  %v628 = vpop.permute.xlu0 %627
  %629 = vrot.lane.b32.xlu0 %v555, 112
  %v630 = vpop.permute.xlu0 %629
  %vm656 = vcmask 7168
  %657 = vst.msk [vmem:[%s4] sm:$0xff] %vm656, %v582
  %658 = vst.msk [vmem:[%s4 + $0x8] sm:$0xff] %vm656, %v584
  %659 = vst.msk [vmem:[%s4 + $0x10] sm:$0xff] %vm656, %v586
  %660 = vst.msk [vmem:[%s4 + $0x18] sm:$0xff] %vm656, %v588
  %661 = vst.msk [vmem:[%s4 + $0x20] sm:$0xff] %vm656, %v590
  %662 = vst.msk [vmem:[%s4 + $0x28] sm:$0xff] %vm656, %v592
  %663 = vst.msk [vmem:[%s4 + $0x30] sm:$0xff] %vm656, %v594
  %664 = vst.msk [vmem:[%s4 + $0x38] sm:$0xff] %vm656, %v596
  %665 = vst.msk [vmem:[%s4 + $0x40] sm:$0xff] %vm656, %v598
  %666 = vst.msk [vmem:[%s4 + $0x48] sm:$0xff] %vm656, %v600
  %667 = vst.msk [vmem:[%s4 + $0x50] sm:$0xff] %vm656, %v602
  %668 = vst.msk [vmem:[%s4 + $0x58] sm:$0xff] %vm656, %v604
  %669 = vst.msk [vmem:[%s4 + $0x60] sm:$0xff] %vm656, %v606
  %670 = vst.msk [vmem:[%s4 + $0x68] sm:$0xff] %vm656, %v608
  %671 = vst.msk [vmem:[%s4 + $0x70] sm:$0xff] %vm656, %v610
  %672 = vst.msk [vmem:[%s4 + $0x78] sm:$0xff] %vm656, %v612
  %673 = vst.msk [vmem:[%s4 + $0x80] sm:$0xff] %vm656, %v614
  %674 = vst.msk [vmem:[%s4 + $0x88] sm:$0xff] %vm656, %v616
  %675 = vst.msk [vmem:[%s4 + $0x90] sm:$0xff] %vm656, %v618
  %676 = vst.msk [vmem:[%s4 + $0x98] sm:$0xff] %vm656, %v620
  %677 = vst.msk [vmem:[%s4 + $0xa0] sm:$0xff] %vm656, %v622
  %678 = vst.msk [vmem:[%s4 + $0xa8] sm:$0xff] %vm656, %v624
  %679 = vst.msk [vmem:[%s4 + $0xb0] sm:$0xff] %vm656, %v626
  %680 = vst.msk [vmem:[%s4 + $0xb8] sm:$0xff] %vm656, %v628
  %681 = vst.msk [vmem:[%s4 + $0xc0] sm:$0xff] %vm656, %v630
  // Predicated region
  $region18: #{factorization_machine.1} parent=0 // pred_check
    _
  $region19: #{factorization_machine.1} parent=0 // pred_check_branch
    %683 = sbr.rel (0) target = $region21
  $region20: #{factorization_machine.1} parent=0 // pred_region
    _
  $region21: #{factorization_machine.1} parent=0 // pred_fallthru
    _
  // Predicated region
  $region22: #{factorization_machine.1} parent=0 // pred_check
    _
  $region23: #{factorization_machine.1} parent=0 // pred_check_branch
    %685 = sbr.rel (0) target = $region25
  $region24: #{factorization_machine.1} parent=0 // pred_region
    _
  $region25: #{factorization_machine.1} parent=0 // pred_fallthru
    _

</llo_original>
